<compile_context>
chip_gen: v5e
topology: v5e:2x2
jax: 0.10.0
libtpu: 0.0.40
codegen_flags: <defaults>
</compile_context>

<pallas_src>
import math

import jax
import jax.numpy as jnp
from jax import lax
from jax.experimental import pallas as pl
from jax.experimental.pallas import tpu as pltpu


EPS = 1e-5
_INV_SQRT2 = 1.0 / math.sqrt(2.0)


def _vmem_capacity_bytes():
    """Per-core VMEM capacity; conservative 64 MiB (v7x) if the query fails."""
    try:
        return int(getattr(pltpu.get_tpu_info(), "vmem_capacity_bytes",
                           64 * 1024 * 1024))
    except Exception:
        return 64 * 1024 * 1024


def _legal_tiles(Ho, Wo):
    """Row tiles T (descending) with T | Ho and lane-aligned T*Wo (or T == Ho)."""
    return [d for d in range(Ho, 0, -1)
            if Ho % d == 0 and (d == Ho or (d * Wo) % 128 == 0)]


def _tile_bytes(T, Wo, C, Co, in_item):
    """Conservative per-tile VMEM estimate: double-buffered inputs + temporaries."""
    slab_e = T * (Wo + 1) * C * in_item        # even-col phase slab tile
    slab_o = T * Wo * C * in_item              # odd-col phase slab tile
    halo = (2 * Wo + 1) * C * in_item          # two 1-row halo blocks
    ins = 2 * (2 * slab_e + 2 * slab_o + halo)
    w = 2 * 9 * C * Co * in_item
    tmp = (2 * slab_e                          # shifted even-row slab copies
           + 9 * T * Wo * C * in_item          # fused (T*Wo, 9C) LHS
           + 2 * 4 * T * Wo * Co)              # f32 acc + transposed copy
    return ins + w + tmp


def _slab_specs(T, Wo, C, Co):
    """BlockSpecs for (p00, p00-halo, p01, p01-halo, p10, p11, w9)."""
    return [
        pl.BlockSpec((1, T, Wo + 1, C), lambda b, t: (b, t, 0, 0)),
        pl.BlockSpec((1, 1, Wo + 1, C), lambda b, t: (b, (t + 1) * T, 0, 0)),
        pl.BlockSpec((1, T, Wo, C), lambda b, t: (b, t, 0, 0)),
        pl.BlockSpec((1, 1, Wo, C), lambda b, t: (b, (t + 1) * T, 0, 0)),
        pl.BlockSpec((1, T, Wo + 1, C), lambda b, t: (b, t, 0, 0)),
        pl.BlockSpec((1, T, Wo, C), lambda b, t: (b, t, 0, 0)),
        pl.BlockSpec((9 * C, Co), lambda b, t: (0, 0)),
    ]


def _conv_tile(p00_ref, h00_ref, p01_ref, h01_ref, p10_ref, p11_ref, w_ref,
               T, Wo, C):
    """One (T*Wo, Co) f32 conv tile: taps rebuilt in VMEM, one fused MXU matmul."""
    a00 = p00_ref[0]                          # (T, Wo+1, C)  even rows, even cols
    a01 = p01_ref[0]                          # (T, Wo,   C)  even rows, odd  cols
    a10 = p10_ref[0]                          # (T, Wo+1, C)  odd  rows, even cols
    a11 = p11_ref[0]                          # (T, Wo,   C)  odd  rows, odd  cols
    if T > 1:                                 # even-row slabs shifted by +1 row (kh=2)
        a00s = jnp.concatenate([a00[1:], h00_ref[0]], axis=0)
        a01s = jnp.concatenate([a01[1:], h01_ref[0]], axis=0)
    else:
        a00s = h00_ref[0]
        a01s = h01_ref[0]

    taps = (a00[:, :Wo, :], a01, a00[:, 1:, :],        # kh = 0, kw = 0..2
            a10[:, :Wo, :], a11, a10[:, 1:, :],        # kh = 1
            a00s[:, :Wo, :], a01s, a00s[:, 1:, :])     # kh = 2

    # (T*Wo, 9C) @ (9C, Co): single MXU matmul, f32 accumulation on-chip.
    lhs = jnp.concatenate([v.reshape(T * Wo, C) for v in taps], axis=1)
    return jnp.dot(lhs, w_ref[...], preferred_element_type=jnp.float32)


def downsample_pallas(x, weight, *, matmul_dtype=jnp.float32):
    """Conv2d(C->2C, 3x3, s=2, p=1, no bias) + InstanceNorm2d + exact GELU.

    x: (B, C, H, W) float32 (NCHW).  weight: (Co=2C, C, 3, 3).
    Returns (B, Co, Ho, Wo) in NCHW.
    """
    B, C, H, W = x.shape
    Co = weight.shape[0]
    assert weight.shape == (Co, C, 3, 3)

    Ho = (H + 2 - 3) // 2 + 1
    Wo = (W + 2 - 3) // 2 + 1
    HW = Ho * Wo

    md = jnp.dtype(matmul_dtype)
    cap = _vmem_capacity_bytes()
    vmem_limit = int(0.75 * cap)              # ~48 MiB on v7x, ~96 MiB on v5e/v6e
    budget = int(0.40 * cap)                  # tile-sizing budget with margin

    # ---- host glue: pad in NCHW, then one slice+transpose per phase slab ----
    Hp, Wp = 2 * Ho + 2, 2 * Wo + 2
    xp = jnp.pad(x, ((0, 0), (0, 0), (1, Hp - H - 1), (1, Wp - W - 1)))

    def phase(rs, cs):
        return jnp.transpose(xp[:, :, rs, cs], (0, 2, 3, 1)).astype(md)

    p00 = phase(slice(0, None, 2), slice(0, None, 2))       # (B, Ho+1, Wo+1, C)
    p01 = phase(slice(0, None, 2), slice(1, 2 * Wo, 2))     # (B, Ho+1, Wo,   C)
    p10 = phase(slice(1, 2 * Ho, 2), slice(0, None, 2))     # (B, Ho,   Wo+1, C)
    p11 = phase(slice(1, 2 * Ho, 2), slice(1, 2 * Wo, 2))   # (B, Ho,   Wo,   C)

    # weight[co, c, kh, kw] -> (9C, Co), rows ordered (kh, kw, c) to match taps.
    w9 = jnp.transpose(weight, (2, 3, 1, 0)).reshape(9 * C, Co).astype(md)

    tiles = _legal_tiles(Ho, Wo)
    y_resident = 2 * 4 * Co * HW              # double-buffered resident out block
    fused_T = next(
        (d for d in tiles
         if _tile_bytes(d, Wo, C, Co, md.itemsize) + y_resident <= budget),
        None)

    if fused_T is not None:
        # ---------------- fused single pass: conv + norm + GELU ----------------
        T = fused_T
        nt = Ho // T
        TWo = T * Wo

        def fused_kernel(p00_ref, h00_ref, p01_ref, h01_ref, p10_ref, p11_ref,
                         w_ref, o_ref):
            t = pl.program_id(1)
            acc = _conv_tile(p00_ref, h00_ref, p01_ref, h01_ref,
                             p10_ref, p11_ref, w_ref, T, Wo, C)
            y_t = acc.T                                    # (Co, T*Wo), lane-dense
            if nt == 1:
                o_ref[0] = y_t.astype(o_ref.dtype)
            else:
                off = pl.multiple_of(t * TWo, 128)
                o_ref[0, :, pl.ds(off, TWo)] = y_t.astype(o_ref.dtype)

            @pl.when(t == nt - 1)
            def _():
                # Whole image resident in the output VMEM block: numerically
                # stable two-pass mean/var (no E[x^2]-E[x]^2 cancellation).
                y = o_ref[0].astype(jnp.float32)           # (Co, HW)
                mean = jnp.mean(y, axis=1, keepdims=True)
                var = jnp.mean((y - mean) ** 2, axis=1, keepdims=True)
                y_n = (y - mean) * lax.rsqrt(var + EPS)
                out = 0.5 * y_n * (1.0 + lax.erf(y_n * _INV_SQRT2))
                o_ref[0] = out.astype(o_ref.dtype)

        out_flat = pl.pallas_call(
            fused_kernel,
            grid=(B, nt),
            in_specs=_slab_specs(T, Wo, C, Co),
            out_specs=pl.BlockSpec((1, Co, HW), lambda b, t: (b, 0, 0)),
            out_shape=jax.ShapeDtypeStruct((B, Co, HW), x.dtype),
            compiler_params=pltpu.CompilerParams(
                dimension_semantics=("parallel", "arbitrary"),
                vmem_limit_bytes=vmem_limit),
        )(p00, p00, p01, p01, p10, p11, w9)

    else:
        # ---------- fallback (very large Co*Ho*Wo): two-pass form ----------
        cands = [d for d in tiles
                 if _tile_bytes(d, Wo, C, Co, md.itemsize)
                 + 2 * 4 * Co * d * Wo <= budget]
        T = cands[0] if cands else tiles[-1]
        nt = Ho // T
        TWo = T * Wo
        inv_n = 1.0 / float(HW)

        def conv_kernel(p00_ref, h00_ref, p01_ref, h01_ref, p10_ref, p11_ref,
                        w_ref, y_ref, ps_ref, pss_ref):
            acc = _conv_tile(p00_ref, h00_ref, p01_ref, h01_ref,
                             p10_ref, p11_ref, w_ref, T, Wo, C)
            y_t = acc.T                                    # (Co, T*Wo)
            y_ref[0] = y_t
            ps_ref[0, 0] = jnp.sum(y_t, axis=1, keepdims=True)        # (Co, 1)
            pss_ref[0, 0] = jnp.sum(y_t * y_t, axis=1, keepdims=True)

        y_flat, psum, psumsq = pl.pallas_call(
            conv_kernel,
            grid=(B, nt),
            in_specs=_slab_specs(T, Wo, C, Co),
            out_specs=(
                pl.BlockSpec((1, Co, TWo), lambda b, t: (b, 0, t)),
                pl.BlockSpec((1, 1, Co, 1), lambda b, t: (b, t, 0, 0)),
                pl.BlockSpec((1, 1, Co, 1), lambda b, t: (b, t, 0, 0)),
            ),
            out_shape=(
                jax.ShapeDtypeStruct((B, Co, HW), jnp.float32),
                jax.ShapeDtypeStruct((B, nt, Co, 1), jnp.float32),
                jax.ShapeDtypeStruct((B, nt, Co, 1), jnp.float32),
            ),
            compiler_params=pltpu.CompilerParams(
                dimension_semantics=("parallel", "parallel"),
                vmem_limit_bytes=vmem_limit),
        )(p00, p00, p01, p01, p10, p11, w9)

        ssum = jnp.sum(psum, axis=1)        # (B, Co, 1)
        ssq = jnp.sum(psumsq, axis=1)       # (B, Co, 1)

        def norm_gelu_kernel(s_ref, ss_ref, y_ref, o_ref):
            mean = s_ref[0] * inv_n                        # (Co, 1)
            var = ss_ref[0] * inv_n - mean * mean          # biased variance
            inv_std = lax.rsqrt(var + EPS)
            y_n = (y_ref[0] - mean) * inv_std              # (Co, T*Wo)
            out = 0.5 * y_n * (1.0 + lax.erf(y_n * _INV_SQRT2))
            o_ref[0] = out.astype(o_ref.dtype)

        out_flat = pl.pallas_call(
            norm_gelu_kernel,
            grid=(B, nt),
            in_specs=[
                pl.BlockSpec((1, Co, 1), lambda b, t: (b, 0, 0)),
                pl.BlockSpec((1, Co, 1), lambda b, t: (b, 0, 0)),
                pl.BlockSpec((1, Co, TWo), lambda b, t: (b, 0, t)),
            ],
            out_specs=pl.BlockSpec((1, Co, TWo), lambda b, t: (b, 0, t)),
            out_shape=jax.ShapeDtypeStruct((B, Co, HW), x.dtype),
            compiler_params=pltpu.CompilerParams(
                dimension_semantics=("parallel", "parallel"),
                vmem_limit_bytes=vmem_limit),
        )(ssum, ssq, y_flat)

    # (B, Co, Ho*Wo) -> (B, Co, Ho, Wo): metadata-only reshape, no extra HBM pass.
    return out_flat.reshape(B, Co, Ho, Wo)


def downsample_reference(x, weight):
    """Pure-JAX reference matching the PyTorch module (f32)."""
    y = lax.conv_general_dilated(
        x, weight, window_strides=(2, 2), padding=((1, 1), (1, 1)),
        dimension_numbers=("NCHW", "OIHW", "NCHW"))
    mean = jnp.mean(y, axis=(2, 3), keepdims=True)
    var = jnp.mean((y - mean) ** 2, axis=(2, 3), keepdims=True)
    y_n = (y - mean) / jnp.sqrt(var + EPS)
    return 0.5 * y_n * (1.0 + lax.erf(y_n / math.sqrt(2.0)))


if __name__ == "__main__":
    key = jax.random.PRNGKey(0)
    k_x, k_w = jax.random.split(key)

    B, C, H, W = 2, 4, 16, 16               # num_ch=4 for this small test
    Co = 2 * C

    x = jax.random.normal(k_x, (B, C, H, W), dtype=jnp.float32)
    fan_in = C * 3 * 3
    bound = 1.0 / math.sqrt(fan_in)
    weight = jax.random.uniform(
        k_w, (Co, C, 3, 3), dtype=jnp.float32, minval=-bound, maxval=bound)

    out = jax.jit(downsample_pallas)(x, weight)
    out = jax.block_until_ready(out)

    ref = jax.block_until_ready(downsample_reference(x, weight))
    assert out.shape == (B, Co, H // 2, W // 2), out.shape
    max_err = float(jnp.max(jnp.abs(out - ref)))
    assert jnp.allclose(out, ref, atol=1e-4, rtol=1e-4), max_err

    print("KERNEL_OK")
</pallas_src>

<mosaic_0001>
module attributes {stable_mosaic.version = 11 : i64} {
  func.func @fused_kernel(%arg0: i32, %arg1: i32, %arg2: memref<1x8x9x4xf32, #tpu.memory_space<vmem>>, %arg3: memref<1x1x9x4xf32, #tpu.memory_space<vmem>>, %arg4: memref<1x8x8x4xf32, #tpu.memory_space<vmem>>, %arg5: memref<1x1x8x4xf32, #tpu.memory_space<vmem>>, %arg6: memref<1x8x9x4xf32, #tpu.memory_space<vmem>>, %arg7: memref<1x8x8x4xf32, #tpu.memory_space<vmem>>, %arg8: memref<36x8xf32, #tpu.memory_space<vmem>>, %arg9: memref<1x8x64xf32, #tpu.memory_space<vmem>>) attributes {dimension_semantics = [#tpu.dimension_semantics<parallel>, #tpu.dimension_semantics<arbitrary>], iteration_bounds = array<i64: 2, 1>, scalar_prefetch = 0 : i64, scratch_operands = 0 : i64, tpu.core_type = #tpu.core_type<tc>, window_params = [{transform_indices = @transform_0, window_bounds = array<i64: 1, 8, 9, 4>}, {transform_indices = @transform_1, window_bounds = array<i64: 1, 1, 9, 4>}, {transform_indices = @transform_2, window_bounds = array<i64: 1, 8, 8, 4>}, {transform_indices = @transform_3, window_bounds = array<i64: 1, 1, 8, 4>}, {transform_indices = @transform_4, window_bounds = array<i64: 1, 8, 9, 4>}, {transform_indices = @transform_5, window_bounds = array<i64: 1, 8, 8, 4>}, {pipeline_mode = #tpu.pipeline_mode<synchronous>, transform_indices = @transform_6, window_bounds = array<i64: 36, 8>}, {transform_indices = @transform_7, window_bounds = array<i64: 1, 8, 64>}]} {
    %c0 = arith.constant 0 : index
    %c0_0 = arith.constant 0 : index
    %c0_1 = arith.constant 0 : index
    %c0_2 = arith.constant 0 : index
    %0 = vector.load %arg2[%c0, %c0_0, %c0_1, %c0_2] : memref<1x8x9x4xf32, #tpu.memory_space<vmem>>, vector<1x8x9x4xf32>
    %1 = vector.shape_cast %0 : vector<1x8x9x4xf32> to vector<8x9x4xf32>
    %c0_3 = arith.constant 0 : index
    %c0_4 = arith.constant 0 : index
    %c0_5 = arith.constant 0 : index
    %c0_6 = arith.constant 0 : index
    %2 = vector.load %arg4[%c0_3, %c0_4, %c0_5, %c0_6] : memref<1x8x8x4xf32, #tpu.memory_space<vmem>>, vector<1x8x8x4xf32>
    %3 = vector.shape_cast %2 : vector<1x8x8x4xf32> to vector<8x8x4xf32>
    %c0_7 = arith.constant 0 : index
    %c0_8 = arith.constant 0 : index
    %c0_9 = arith.constant 0 : index
    %c0_10 = arith.constant 0 : index
    %4 = vector.load %arg6[%c0_7, %c0_8, %c0_9, %c0_10] : memref<1x8x9x4xf32, #tpu.memory_space<vmem>>, vector<1x8x9x4xf32>
    %5 = vector.shape_cast %4 : vector<1x8x9x4xf32> to vector<8x9x4xf32>
    %c0_11 = arith.constant 0 : index
    %c0_12 = arith.constant 0 : index
    %c0_13 = arith.constant 0 : index
    %c0_14 = arith.constant 0 : index
    %6 = vector.load %arg7[%c0_11, %c0_12, %c0_13, %c0_14] : memref<1x8x8x4xf32, #tpu.memory_space<vmem>>, vector<1x8x8x4xf32>
    %7 = vector.shape_cast %6 : vector<1x8x8x4xf32> to vector<8x8x4xf32>
    %8 = vector.extract_strided_slice %1 {offsets = [1, 0, 0], sizes = [7, 9, 4], strides = [1, 1, 1]} : vector<8x9x4xf32> to vector<7x9x4xf32>
    %c0_15 = arith.constant 0 : index
    %c0_16 = arith.constant 0 : index
    %c0_17 = arith.constant 0 : index
    %c0_18 = arith.constant 0 : index
    %9 = vector.load %arg3[%c0_15, %c0_16, %c0_17, %c0_18] : memref<1x1x9x4xf32, #tpu.memory_space<vmem>>, vector<1x1x9x4xf32>
    %10 = vector.shape_cast %9 : vector<1x1x9x4xf32> to vector<1x9x4xf32>
    %11 = tpu.concatenate %8, %10 in 0 : vector<7x9x4xf32>, vector<1x9x4xf32> -> vector<8x9x4xf32>
    %12 = vector.extract_strided_slice %3 {offsets = [1, 0, 0], sizes = [7, 8, 4], strides = [1, 1, 1]} : vector<8x8x4xf32> to vector<7x8x4xf32>
    %c0_19 = arith.constant 0 : index
    %c0_20 = arith.constant 0 : index
    %c0_21 = arith.constant 0 : index
    %c0_22 = arith.constant 0 : index
    %13 = vector.load %arg5[%c0_19, %c0_20, %c0_21, %c0_22] : memref<1x1x8x4xf32, #tpu.memory_space<vmem>>, vector<1x1x8x4xf32>
    %14 = vector.shape_cast %13 : vector<1x1x8x4xf32> to vector<1x8x4xf32>
    %15 = tpu.concatenate %12, %14 in 0 : vector<7x8x4xf32>, vector<1x8x4xf32> -> vector<8x8x4xf32>
    %16 = vector.extract_strided_slice %1 {offsets = [0, 0, 0], sizes = [8, 8, 4], strides = [1, 1, 1]} : vector<8x9x4xf32> to vector<8x8x4xf32>
    %17 = vector.extract_strided_slice %1 {offsets = [0, 1, 0], sizes = [8, 8, 4], strides = [1, 1, 1]} : vector<8x9x4xf32> to vector<8x8x4xf32>
    %18 = vector.extract_strided_slice %5 {offsets = [0, 0, 0], sizes = [8, 8, 4], strides = [1, 1, 1]} : vector<8x9x4xf32> to vector<8x8x4xf32>
    %19 = vector.extract_strided_slice %5 {offsets = [0, 1, 0], sizes = [8, 8, 4], strides = [1, 1, 1]} : vector<8x9x4xf32> to vector<8x8x4xf32>
    %20 = vector.extract_strided_slice %11 {offsets = [0, 0, 0], sizes = [8, 8, 4], strides = [1, 1, 1]} : vector<8x9x4xf32> to vector<8x8x4xf32>
    %21 = vector.extract_strided_slice %11 {offsets = [0, 1, 0], sizes = [8, 8, 4], strides = [1, 1, 1]} : vector<8x9x4xf32> to vector<8x8x4xf32>
    %22 = vector.shape_cast %16 : vector<8x8x4xf32> to vector<64x4xf32>
    %23 = vector.shape_cast %3 : vector<8x8x4xf32> to vector<64x4xf32>
    %24 = vector.shape_cast %17 : vector<8x8x4xf32> to vector<64x4xf32>
    %25 = vector.shape_cast %18 : vector<8x8x4xf32> to vector<64x4xf32>
    %26 = vector.shape_cast %7 : vector<8x8x4xf32> to vector<64x4xf32>
    %27 = vector.shape_cast %19 : vector<8x8x4xf32> to vector<64x4xf32>
    %28 = vector.shape_cast %20 : vector<8x8x4xf32> to vector<64x4xf32>
    %29 = vector.shape_cast %15 : vector<8x8x4xf32> to vector<64x4xf32>
    %30 = vector.shape_cast %21 : vector<8x8x4xf32> to vector<64x4xf32>
    %31 = tpu.concatenate %22, %23, %24, %25, %26, %27, %28, %29, %30 in 1 : vector<64x4xf32>, vector<64x4xf32>, vector<64x4xf32>, vector<64x4xf32>, vector<64x4xf32>, vector<64x4xf32>, vector<64x4xf32>, vector<64x4xf32>, vector<64x4xf32> -> vector<64x36xf32>
    %c0_23 = arith.constant 0 : index
    %c0_24 = arith.constant 0 : index
    %32 = vector.load %arg8[%c0_23, %c0_24] : memref<36x8xf32, #tpu.memory_space<vmem>>, vector<36x8xf32>
    %cst = arith.constant dense<0.000000e+00> : vector<64x8xf32>
    %33 = tpu.matmul %31, %32, %cst {dimension_numbers = #tpu.dot_dimension_numbers<[1], [0], [0], [1], [0, 0, 1, 1], [], []>} : vector<64x36xf32>, vector<36x8xf32>, vector<64x8xf32> -> vector<64x8xf32>
    %34 = tpu.transpose %33, [1, 0] : vector<64x8xf32> -> vector<8x64xf32>
    %c0_25 = arith.constant 0 : index
    %c0_26 = arith.constant 0 : index
    %c0_27 = arith.constant 0 : index
    %35 = vector.load %arg9[%c0_25, %c0_26, %c0_27] : memref<1x8x64xf32, #tpu.memory_space<vmem>>, vector<1x8x64xf32>
    %36 = vector.shape_cast %35 : vector<1x8x64xf32> to vector<8x64xf32>
    %37 = vector.shape_cast %34 : vector<8x64xf32> to vector<1x8x64xf32>
    tpu.vector_store %arg9[%c0_25, %c0_26, %c0_27], %37 {strides = array<i32>} : memref<1x8x64xf32, #tpu.memory_space<vmem>>, vector<1x8x64xf32>,
    %c0_i32 = arith.constant 0 : i32
    %38 = arith.cmpi eq, %arg1, %c0_i32 : i32
    %39 = arith.extui %38 : i1 to i32
    %c0_i32_28 = arith.constant 0 : i32
    %40 = arith.cmpi ne, %39, %c0_i32_28 : i32
    scf.if %40 {
      %c0_29 = arith.constant 0 : index
      %c0_30 = arith.constant 0 : index
      %c0_31 = arith.constant 0 : index
      %41 = vector.load %arg9[%c0_29, %c0_30, %c0_31] : memref<1x8x64xf32, #tpu.memory_space<vmem>>, vector<1x8x64xf32>
      %42 = vector.shape_cast %41 : vector<1x8x64xf32> to vector<8x64xf32>
      %cst_32 = arith.constant dense<0.000000e+00> : vector<8xf32>
      %43 = vector.multi_reduction <add>, %42, %cst_32 [1] : vector<8x64xf32> to vector<8xf32>
      %44 = vector.shape_cast %43 : vector<8xf32> to vector<8x1xf32>
      %cst_33 = arith.constant 6.400000e+01 : f32
      %45 = vector.broadcast %cst_33 : f32 to vector<8x1xf32>
      %46 = arith.divf %44, %45 : vector<8x1xf32>
      %47 = vector.broadcast %46 : vector<8x1xf32> to vector<8x64xf32>
      %48 = arith.subf %42, %47 : vector<8x64xf32>
      %49 = arith.mulf %48, %48 : vector<8x64xf32>
      %cst_34 = arith.constant dense<0.000000e+00> : vector<8xf32>
      %50 = vector.multi_reduction <add>, %49, %cst_34 [1] : vector<8x64xf32> to vector<8xf32>
      %51 = vector.shape_cast %50 : vector<8xf32> to vector<8x1xf32>
      %cst_35 = arith.constant 6.400000e+01 : f32
      %52 = vector.broadcast %cst_35 : f32 to vector<8x1xf32>
      %53 = arith.divf %51, %52 : vector<8x1xf32>
      %54 = vector.broadcast %46 : vector<8x1xf32> to vector<8x64xf32>
      %55 = arith.subf %42, %54 : vector<8x64xf32>
      %cst_36 = arith.constant 9.99999974E-6 : f32
      %56 = vector.broadcast %cst_36 : f32 to vector<8x1xf32>
      %57 = arith.addf %53, %56 : vector<8x1xf32>
      %58 = math.rsqrt %57 : vector<8x1xf32>
      %59 = vector.broadcast %58 : vector<8x1xf32> to vector<8x64xf32>
      %60 = arith.mulf %55, %59 : vector<8x64xf32>
      %cst_37 = arith.constant 5.000000e-01 : f32
      %61 = vector.broadcast %cst_37 : f32 to vector<8x64xf32>
      %62 = arith.mulf %61, %60 : vector<8x64xf32>
      %cst_38 = arith.constant 0.707106769 : f32
      %63 = vector.broadcast %cst_38 : f32 to vector<8x64xf32>
      %64 = arith.mulf %60, %63 : vector<8x64xf32>
      %65 = math.erf %64 : vector<8x64xf32>
      %cst_39 = arith.constant 1.000000e+00 : f32
      %66 = vector.broadcast %cst_39 : f32 to vector<8x64xf32>
      %67 = arith.addf %66, %65 : vector<8x64xf32>
      %68 = arith.mulf %62, %67 : vector<8x64xf32>
      %c0_40 = arith.constant 0 : index
      %c0_41 = arith.constant 0 : index
      %c0_42 = arith.constant 0 : index
      %69 = vector.load %arg9[%c0_40, %c0_41, %c0_42] : memref<1x8x64xf32, #tpu.memory_space<vmem>>, vector<1x8x64xf32>
      %70 = vector.shape_cast %69 : vector<1x8x64xf32> to vector<8x64xf32>
      %71 = vector.shape_cast %68 : vector<8x64xf32> to vector<1x8x64xf32>
      tpu.vector_store %arg9[%c0_40, %c0_41, %c0_42], %71 {strides = array<i32>} : memref<1x8x64xf32, #tpu.memory_space<vmem>>, vector<1x8x64xf32>,
    } else {
    }
    return
  }
  func.func @transform_0(%arg0: i32, %arg1: i32) -> (i32, i32, i32, i32) {
    %c0_i32 = arith.constant 0 : i32
    %c0_i32_0 = arith.constant 0 : i32
    %c0_i32_1 = arith.constant 0 : i32
    return %arg0, %arg1, %c0_i32, %c0_i32_0 : i32, i32, i32, i32
  }
  func.func @transform_1(%arg0: i32, %arg1: i32) -> (i32, i32, i32, i32) {
    %c1_i32 = arith.constant 1 : i32
    %0 = arith.addi %arg1, %c1_i32 : i32
    %c8_i32 = arith.constant 8 : i32
    %1 = arith.muli %0, %c8_i32 : i32
    %c0_i32 = arith.constant 0 : i32
    %c0_i32_0 = arith.constant 0 : i32
    %c0_i32_1 = arith.constant 0 : i32
    return %arg0, %1, %c0_i32, %c0_i32_0 : i32, i32, i32, i32
  }
  func.func @transform_2(%arg0: i32, %arg1: i32) -> (i32, i32, i32, i32) {
    %c0_i32 = arith.constant 0 : i32
    %c0_i32_0 = arith.constant 0 : i32
    %c0_i32_1 = arith.constant 0 : i32
    return %arg0, %arg1, %c0_i32, %c0_i32_0 : i32, i32, i32, i32
  }
  func.func @transform_3(%arg0: i32, %arg1: i32) -> (i32, i32, i32, i32) {
    %c1_i32 = arith.constant 1 : i32
    %0 = arith.addi %arg1, %c1_i32 : i32
    %c8_i32 = arith.constant 8 : i32
    %1 = arith.muli %0, %c8_i32 : i32
    %c0_i32 = arith.constant 0 : i32
    %c0_i32_0 = arith.constant 0 : i32
    %c0_i32_1 = arith.constant 0 : i32
    return %arg0, %1, %c0_i32, %c0_i32_0 : i32, i32, i32, i32
  }
  func.func @transform_4(%arg0: i32, %arg1: i32) -> (i32, i32, i32, i32) {
    %c0_i32 = arith.constant 0 : i32
    %c0_i32_0 = arith.constant 0 : i32
    %c0_i32_1 = arith.constant 0 : i32
    return %arg0, %arg1, %c0_i32, %c0_i32_0 : i32, i32, i32, i32
  }
  func.func @transform_5(%arg0: i32, %arg1: i32) -> (i32, i32, i32, i32) {
    %c0_i32 = arith.constant 0 : i32
    %c0_i32_0 = arith.constant 0 : i32
    %c0_i32_1 = arith.constant 0 : i32
    return %arg0, %arg1, %c0_i32, %c0_i32_0 : i32, i32, i32, i32
  }
  func.func @transform_6(%arg0: i32, %arg1: i32) -> (i32, i32) {
    %c0_i32 = arith.constant 0 : i32
    %c0_i32_0 = arith.constant 0 : i32
    %c0_i32_1 = arith.constant 0 : i32
    return %c0_i32, %c0_i32_0 : i32, i32
  }
  func.func @transform_7(%arg0: i32, %arg1: i32) -> (i32, i32, i32) {
    %c0_i32 = arith.constant 0 : i32
    %c0_i32_0 = arith.constant 0 : i32
    %c0_i32_1 = arith.constant 0 : i32
    return %arg0, %c0_i32, %c0_i32_0 : i32, i32, i32
  }
}

</mosaic_0001>

<llo_original>
// kernel: downsample_pallas.1
$region0: #{downsample_pallas.1}
  #allocation0 [shape = 'u32[]', space=smem, size = 0x4, offset = 0x4, fixed_abs, tag = 'smem constant byte address 0x4 - core index']
  #allocation1 [shape = 'u32[72,128]{1,0:T(1,128)}', space=vmem, size = 0x9000, scoped, tag = 'internal scratch']
  %s0 = inlined_call_operand.vmem [shape: f32[2,9,9,4], index: 0, kind: input, shape index: {}, may-alias: {0,1}]
  %s1 = inlined_call_operand.vmem [shape: f32[2,9,9,4], index: 1, kind: input, shape index: {}, may-alias: {0,1}]
  %s2 = inlined_call_operand.vmem [shape: f32[2,9,8,4], index: 2, kind: input, shape index: {}, may-alias: {2,3}]
  %s3 = inlined_call_operand.vmem [shape: f32[2,9,8,4], index: 3, kind: input, shape index: {}, may-alias: {2,3}]
  %s4 = inlined_call_operand.vmem [shape: f32[2,8,9,4], index: 4, kind: input, shape index: {}]
  %s5 = inlined_call_operand.vmem [shape: f32[2,8,8,4], index: 5, kind: input, shape index: {}]
  %s6 = inlined_call_operand.vmem [shape: f32[36,8], index: 6, kind: input, shape index: {}]
  %s7 = inlined_call_operand.vmem [shape: f32[2,8,64], index: 7, kind: output, shape index: {}]
  %s8 = sld [smem:[#allocation0]]
  $region65: #{downsample_pallas.1} parent=0
    _
  %s10 = ssub.s32 1, %s8
  %s11 = scalar_select 0, %s10, %s8
  loop: start=0, step=1, limit=4
  $region2: #{downsample_pallas.1} parent=0 // loop_pre_header
    _
  $region3: #{downsample_pallas.1} parent=0 // loop_header
    %s13 = sphi 0, %s17
    %p14 = scmp.ge.s32.totalorder %s13, 4
    %s20 = sphi 0, %s32
    %s21 = sphi 0, %s28
    %s22 = sphi 0, %s20
    %s23 = sphi 0, %s21
    %s24 = sphi 0, %s22
    %s25 = sphi 0, %s23
    %s37 = sphi 0, %s39
    %s40 = sphi 0, %s37
    %s41 = sphi 0, %s40
    %s57 = sphi 0, %s41
    %s69 = sphi 0, %s71
    %s72 = sphi 0, %s69
    %s73 = sphi 0, %s72
    %s89 = sphi 0, %s73
    %s97 = sphi 0, %s99
    %s100 = sphi 0, %s97
    %s101 = sphi 0, %s100
    %s117 = sphi 0, %s101
    %s129 = sphi 0, %s131
    %s132 = sphi 0, %s129
    %s133 = sphi 0, %s132
    %s149 = sphi 0, %s133
    %s157 = sphi 0, %s159
    %s160 = sphi 0, %s157
    %s161 = sphi 0, %s160
    %s177 = sphi 0, %s161
    %s185 = sphi 0, %s187
    %s188 = sphi 0, %s185
    %s189 = sphi 0, %s188
    %s205 = sphi 0, %s189
    %s209 = sphi 0, %s209
    %s211 = sphi 0, %s209
    %s212 = sphi 0, %s211
    %s226 = sphi 0, %s212
    %s232 = sphi 0, %s234
    %s235 = sphi 0, %s232
    %s236 = sphi 0, %s235
    %s252 = sphi 0, %s236
  $region4: #{downsample_pallas.1} parent=0 // loop_header_branch
    %16 = sbr.rel (%p14) target = $region8
  $region5: #{downsample_pallas.1} parent=0 // loop_body
    %s18 = ssub.s32 %s13, 1
    %s19 = ssub.s32 %s13, 2
    %s26 = sadd.s32 1, %s21
    %p27 = scmp.ge.s32.totalorder %s26, 1
    %s28 = scalar_select %p27, 0, %s26
    %s29 = sadd.s32 1, %s20
    %s30 = scalar_select %p27, %s29, %s20
    %p31 = scmp.ge.s32.totalorder %s30, 2
    %s32 = scalar_select %p31, 0, %s30
    %s33 = ssub.s32 %s20, %s32
    %s34 = ssub.s32 %s21, %s28
    %s35 = sor.u32 %s33, %s34
    %p36 = scmp.eq.s32.totalorder %s35, 0
    %s38 = sadd.s32 %s37, 1
    %s39 = scalar_select %p36, %s37, %s38
    %p42 = pneg %p36
    %p43 = scmp.eq.s32.totalorder %s13, 1
    %p44 = por %p42, %p43
    %p45 = scmp.ne.s32.totalorder %s37, %s40
    %p46 = scmp.eq.s32.totalorder %s13, 0
    %p47 = por %p45, %p46
    %p48 = scmp.ne.s32.totalorder %s37, %s40
    %p49 = scmp.eq.s32.totalorder %s18, 1
    %p50 = por %p48, %p49
    %p51 = scmp.ne.s32.totalorder %s40, %s41
    %p52 = scmp.eq.s32.totalorder %s18, 0
    %p53 = por %p51, %p52
    %p54 = scmp.ne.s32.totalorder %s40, %s41
    %p55 = scmp.eq.s32.totalorder %s19, 1
    %p56 = por %p54, %p55
    %p58 = scmp.ne.s32.totalorder %s41, %s57
    %p59 = scmp.eq.s32.totalorder %s19, 0
    %p60 = por %p58, %p59
    %s61 = sadd.s32 %s21, 1
    %s62 = smul.u32 %s61, 8
    %s63 = sadd.s32 %s28, 1
    %s64 = smul.u32 %s63, 8
    %s65 = ssub.s32 %s20, %s32
    %s66 = ssub.s32 %s62, %s64
    %s67 = sor.u32 %s65, %s66
    %p68 = scmp.eq.s32.totalorder %s67, 0
    %s70 = sadd.s32 %s69, 1
    %s71 = scalar_select %p68, %s69, %s70
    %p74 = pneg %p68
    %p75 = scmp.eq.s32.totalorder %s13, 1
    %p76 = por %p74, %p75
    %p77 = scmp.ne.s32.totalorder %s69, %s72
    %p78 = scmp.eq.s32.totalorder %s13, 0
    %p79 = por %p77, %p78
    %p80 = scmp.ne.s32.totalorder %s69, %s72
    %p81 = scmp.eq.s32.totalorder %s18, 1
    %p82 = por %p80, %p81
    %p83 = scmp.ne.s32.totalorder %s72, %s73
    %p84 = scmp.eq.s32.totalorder %s18, 0
    %p85 = por %p83, %p84
    %p86 = scmp.ne.s32.totalorder %s72, %s73
    %p87 = scmp.eq.s32.totalorder %s19, 1
    %p88 = por %p86, %p87
    %p90 = scmp.ne.s32.totalorder %s73, %s89
    %p91 = scmp.eq.s32.totalorder %s19, 0
    %p92 = por %p90, %p91
    %s93 = ssub.s32 %s20, %s32
    %s94 = ssub.s32 %s21, %s28
    %s95 = sor.u32 %s93, %s94
    %p96 = scmp.eq.s32.totalorder %s95, 0
    %s98 = sadd.s32 %s97, 1
    %s99 = scalar_select %p96, %s97, %s98
    %p102 = pneg %p96
    %p103 = scmp.eq.s32.totalorder %s13, 1
    %p104 = por %p102, %p103
    %p105 = scmp.ne.s32.totalorder %s97, %s100
    %p106 = scmp.eq.s32.totalorder %s13, 0
    %p107 = por %p105, %p106
    %p108 = scmp.ne.s32.totalorder %s97, %s100
    %p109 = scmp.eq.s32.totalorder %s18, 1
    %p110 = por %p108, %p109
    %p111 = scmp.ne.s32.totalorder %s100, %s101
    %p112 = scmp.eq.s32.totalorder %s18, 0
    %p113 = por %p111, %p112
    %p114 = scmp.ne.s32.totalorder %s100, %s101
    %p115 = scmp.eq.s32.totalorder %s19, 1
    %p116 = por %p114, %p115
    %p118 = scmp.ne.s32.totalorder %s101, %s117
    %p119 = scmp.eq.s32.totalorder %s19, 0
    %p120 = por %p118, %p119
    %s121 = sadd.s32 %s21, 1
    %s122 = smul.u32 %s121, 8
    %s123 = sadd.s32 %s28, 1
    %s124 = smul.u32 %s123, 8
    %s125 = ssub.s32 %s20, %s32
    %s126 = ssub.s32 %s122, %s124
    %s127 = sor.u32 %s125, %s126
    %p128 = scmp.eq.s32.totalorder %s127, 0
    %s130 = sadd.s32 %s129, 1
    %s131 = scalar_select %p128, %s129, %s130
    %p134 = pneg %p128
    %p135 = scmp.eq.s32.totalorder %s13, 1
    %p136 = por %p134, %p135
    %p137 = scmp.ne.s32.totalorder %s129, %s132
    %p138 = scmp.eq.s32.totalorder %s13, 0
    %p139 = por %p137, %p138
    %p140 = scmp.ne.s32.totalorder %s129, %s132
    %p141 = scmp.eq.s32.totalorder %s18, 1
    %p142 = por %p140, %p141
    %p143 = scmp.ne.s32.totalorder %s132, %s133
    %p144 = scmp.eq.s32.totalorder %s18, 0
    %p145 = por %p143, %p144
    %p146 = scmp.ne.s32.totalorder %s132, %s133
    %p147 = scmp.eq.s32.totalorder %s19, 1
    %p148 = por %p146, %p147
    %p150 = scmp.ne.s32.totalorder %s133, %s149
    %p151 = scmp.eq.s32.totalorder %s19, 0
    %p152 = por %p150, %p151
    %s153 = ssub.s32 %s20, %s32
    %s154 = ssub.s32 %s21, %s28
    %s155 = sor.u32 %s153, %s154
    %p156 = scmp.eq.s32.totalorder %s155, 0
    %s158 = sadd.s32 %s157, 1
    %s159 = scalar_select %p156, %s157, %s158
    %p162 = pneg %p156
    %p163 = scmp.eq.s32.totalorder %s13, 1
    %p164 = por %p162, %p163
    %p165 = scmp.ne.s32.totalorder %s157, %s160
    %p166 = scmp.eq.s32.totalorder %s13, 0
    %p167 = por %p165, %p166
    %p168 = scmp.ne.s32.totalorder %s157, %s160
    %p169 = scmp.eq.s32.totalorder %s18, 1
    %p170 = por %p168, %p169
    %p171 = scmp.ne.s32.totalorder %s160, %s161
    %p172 = scmp.eq.s32.totalorder %s18, 0
    %p173 = por %p171, %p172
    %p174 = scmp.ne.s32.totalorder %s160, %s161
    %p175 = scmp.eq.s32.totalorder %s19, 1
    %p176 = por %p174, %p175
    %p178 = scmp.ne.s32.totalorder %s161, %s177
    %p179 = scmp.eq.s32.totalorder %s19, 0
    %p180 = por %p178, %p179
    %s181 = ssub.s32 %s20, %s32
    %s182 = ssub.s32 %s21, %s28
    %s183 = sor.u32 %s181, %s182
    %p184 = scmp.eq.s32.totalorder %s183, 0
    %s186 = sadd.s32 %s185, 1
    %s187 = scalar_select %p184, %s185, %s186
    %p190 = pneg %p184
    %p191 = scmp.eq.s32.totalorder %s13, 1
    %p192 = por %p190, %p191
    %p193 = scmp.ne.s32.totalorder %s185, %s188
    %p194 = scmp.eq.s32.totalorder %s13, 0
    %p195 = por %p193, %p194
    %p196 = scmp.ne.s32.totalorder %s185, %s188
    %p197 = scmp.eq.s32.totalorder %s18, 1
    %p198 = por %p196, %p197
    %p199 = scmp.ne.s32.totalorder %s188, %s189
    %p200 = scmp.eq.s32.totalorder %s18, 0
    %p201 = por %p199, %p200
    %p202 = scmp.ne.s32.totalorder %s188, %s189
    %p203 = scmp.eq.s32.totalorder %s19, 1
    %p204 = por %p202, %p203
    %p206 = scmp.ne.s32.totalorder %s189, %s205
    %p207 = scmp.eq.s32.totalorder %s19, 0
    %p208 = por %p206, %p207
    %s210 = sadd.s32 %s209, 1
    %p213 = scmp.eq.s32.totalorder %s13, 1
    %p214 = scmp.ne.s32.totalorder %s209, %s211
    %p215 = scmp.eq.s32.totalorder %s13, 0
    %p216 = por %p214, %p215
    %p217 = scmp.ne.s32.totalorder %s209, %s211
    %p218 = scmp.eq.s32.totalorder %s18, 1
    %p219 = por %p217, %p218
    %p220 = scmp.ne.s32.totalorder %s211, %s212
    %p221 = scmp.eq.s32.totalorder %s18, 0
    %p222 = por %p220, %p221
    %p223 = scmp.ne.s32.totalorder %s211, %s212
    %p224 = scmp.eq.s32.totalorder %s19, 1
    %p225 = por %p223, %p224
    %p227 = scmp.ne.s32.totalorder %s212, %s226
    %p228 = scmp.eq.s32.totalorder %s19, 0
    %p229 = por %p227, %p228
    %s230 = ssub.s32 %s20, %s32
    %p231 = scmp.eq.s32.totalorder %s230, 0
    %s233 = sadd.s32 %s232, 1
    %s234 = scalar_select %p231, %s232, %s233
    %p237 = pneg %p231
    %p238 = scmp.eq.s32.totalorder %s13, 1
    %p239 = por %p237, %p238
    %p240 = scmp.ne.s32.totalorder %s232, %s235
    %p241 = scmp.eq.s32.totalorder %s13, 0
    %p242 = por %p240, %p241
    %p243 = scmp.ne.s32.totalorder %s232, %s235
    %p244 = scmp.eq.s32.totalorder %s18, 1
    %p245 = por %p243, %p244
    %p246 = scmp.ne.s32.totalorder %s235, %s236
    %p247 = scmp.eq.s32.totalorder %s18, 0
    %p248 = por %p246, %p247
    %p249 = scmp.ne.s32.totalorder %s235, %s236
    %p250 = scmp.eq.s32.totalorder %s19, 1
    %p251 = por %p249, %p250
    %p253 = scmp.ne.s32.totalorder %s236, %s252
    %p254 = scmp.eq.s32.totalorder %s19, 0
    %p255 = por %p253, %p254
    %p256 = scmp.le.s32.totalorder 1, %s13
    %p257 = scmp.lt.s32.totalorder %s13, 3
    %p258 = pnand %p256, %p257
    %p259 = pneg %p258
    // Predicated region
    $region9: #{downsample_pallas.1} parent=5 // pred_check
      _
    $region10: #{downsample_pallas.1} parent=5 // pred_check_branch
      %261 = sbr.rel (%p258) target = $region12
    $region11: #{downsample_pallas.1} parent=5 // pred_region
      %s262 = ssub.s32 %s13, 1
      // Predicated region
      $region13: #{downsample_pallas.1} parent=11 // pred_check
        %p263 = pneg %p222
      $region14: #{downsample_pallas.1} parent=11 // pred_check_branch
        %265 = sbr.rel (%p263) target = $region16
      $region15: #{downsample_pallas.1} parent=11 // pred_region
        _
      $region16: #{downsample_pallas.1} parent=11 // pred_fallthru
        _
    $region12: #{downsample_pallas.1} parent=5 // pred_fallthru
      _
    %p266 = scmp.lt.s32.totalorder %s13, 2
    // Predicated region
    $region17: #{downsample_pallas.1} parent=5 // pred_check
      %p267 = pneg %p266
    $region18: #{downsample_pallas.1} parent=5 // pred_check_branch
      %269 = sbr.rel (%p267) target = $region20
    $region19: #{downsample_pallas.1} parent=5 // pred_region
      // Predicated region
      $region21: #{downsample_pallas.1} parent=19 // pred_check
        %p270 = pneg %p47
      $region22: #{downsample_pallas.1} parent=19 // pred_check_branch
        %272 = sbr.rel (%p270) target = $region24
      $region23: #{downsample_pallas.1} parent=19 // pred_region
        %s273 = smul.u32 8, %s21
        %s274 = ssub.s32 9, %s273
        %p275 = scmp.lt.s32.totalorder %s274, 8
        %s276 = scalar_select %p275, %s274, 8
        %s277 = smul.u32 8, %s276
        %s278 = smul.u32 %s277, 2
        %p279 = scmp.lt.s32.totalorder %s20, 1
        %s280 = scalar_select %p279, %s20, 1
        %p281 = scmp.lt.s32.totalorder %s273, 8
        %s282 = scalar_select %p281, %s273, 8
        %s283 = smul.addr %s282, 2
        %s284 = smul.addr %s280, 18
        %s285 = sadd.s32 %s283, %s284
        %s286 = smul.addr %s285, 8
        %s287 = scalar_lea.vmem %s0, %s286
        %s288 = smul.u32 8, %s21
        %s289 = ssub.s32 9, %s288
        %p290 = scmp.lt.s32.totalorder %s289, 8
        %s291 = scalar_select %p290, %s289, 8
        %s292 = smul.u32 8, %s291
        %s293 = smul.u32 %s292, 2
      $region24: #{downsample_pallas.1} parent=19 // pred_fallthru
        _
      // Predicated region
      $region25: #{downsample_pallas.1} parent=19 // pred_check
        %p294 = pneg %p79
      $region26: #{downsample_pallas.1} parent=19 // pred_check_branch
        %296 = sbr.rel (%p294) target = $region28
      $region27: #{downsample_pallas.1} parent=19 // pred_region
        %s297 = sadd.s32 %s21, 1
        %s298 = smul.u32 %s297, 8
        %p299 = scmp.lt.s32.totalorder %s20, 1
        %s300 = scalar_select %p299, %s20, 1
        %p301 = scmp.lt.s32.totalorder %s298, 8
        %s302 = scalar_select %p301, %s298, 8
        %s303 = smul.addr %s302, 2
        %s304 = smul.addr %s300, 18
        %s305 = sadd.s32 %s303, %s304
        %s306 = smul.addr %s305, 8
        %s307 = scalar_lea.vmem %s1, %s306
        %s308 = sadd.s32 %s21, 1
        %s309 = smul.u32 %s308, 8
      $region28: #{downsample_pallas.1} parent=19 // pred_fallthru
        _
      // Predicated region
      $region29: #{downsample_pallas.1} parent=19 // pred_check
        %p310 = pneg %p107
      $region30: #{downsample_pallas.1} parent=19 // pred_check_branch
        %312 = sbr.rel (%p310) target = $region32
      $region31: #{downsample_pallas.1} parent=19 // pred_region
        %s313 = smul.u32 8, %s21
        %s314 = ssub.s32 9, %s313
        %p315 = scmp.lt.s32.totalorder %s314, 8
        %s316 = scalar_select %p315, %s314, 8
        %s317 = smul.u32 8, %s316
        %p318 = scmp.lt.s32.totalorder %s20, 1
        %s319 = scalar_select %p318, %s20, 1
        %p320 = scmp.lt.s32.totalorder %s313, 8
        %s321 = scalar_select %p320, %s313, 8
        %s322 = smul.addr %s319, 9
        %s323 = sadd.s32 %s321, %s322
        %s324 = smul.addr %s323, 8
        %s325 = scalar_lea.vmem %s2, %s324
        %s326 = smul.u32 8, %s21
        %s327 = ssub.s32 9, %s326
        %p328 = scmp.lt.s32.totalorder %s327, 8
        %s329 = scalar_select %p328, %s327, 8
        %s330 = smul.u32 8, %s329
      $region32: #{downsample_pallas.1} parent=19 // pred_fallthru
        _
      // Predicated region
      $region33: #{downsample_pallas.1} parent=19 // pred_check
        %p331 = pneg %p139
      $region34: #{downsample_pallas.1} parent=19 // pred_check_branch
        %333 = sbr.rel (%p331) target = $region36
      $region35: #{downsample_pallas.1} parent=19 // pred_region
        %s334 = sadd.s32 %s21, 1
        %s335 = smul.u32 %s334, 8
        %p336 = scmp.lt.s32.totalorder %s20, 1
        %s337 = scalar_select %p336, %s20, 1
        %p338 = scmp.lt.s32.totalorder %s335, 8
        %s339 = scalar_select %p338, %s335, 8
        %s340 = smul.addr %s337, 9
        %s341 = sadd.s32 %s339, %s340
        %s342 = smul.addr %s341, 8
        %s343 = scalar_lea.vmem %s3, %s342
        %s344 = sadd.s32 %s21, 1
        %s345 = smul.u32 %s344, 8
      $region36: #{downsample_pallas.1} parent=19 // pred_fallthru
        _
      // Predicated region
      $region37: #{downsample_pallas.1} parent=19 // pred_check
        %p346 = pneg %p167
      $region38: #{downsample_pallas.1} parent=19 // pred_check_branch
        %348 = sbr.rel (%p346) target = $region40
      $region39: #{downsample_pallas.1} parent=19 // pred_region
        %s349 = smul.u32 8, %s21
        %p350 = scmp.lt.s32.totalorder %s20, 1
        %s351 = scalar_select %p350, %s20, 1
        %p352 = scmp.lt.s32.totalorder %s349, 7
        %s353 = scalar_select %p352, %s349, 7
        %s354 = smul.addr %s353, 2
        %s355 = smul.addr %s351, 16
        %s356 = sadd.s32 %s354, %s355
        %s357 = smul.addr %s356, 8
        %s358 = scalar_lea.vmem %s4, %s357
        %s359 = smul.u32 8, %s21
      $region40: #{downsample_pallas.1} parent=19 // pred_fallthru
        _
      // Predicated region
      $region41: #{downsample_pallas.1} parent=19 // pred_check
        %p360 = pneg %p195
      $region42: #{downsample_pallas.1} parent=19 // pred_check_branch
        %362 = sbr.rel (%p360) target = $region44
      $region43: #{downsample_pallas.1} parent=19 // pred_region
        %s363 = smul.u32 8, %s21
        %p364 = scmp.lt.s32.totalorder %s20, 1
        %s365 = scalar_select %p364, %s20, 1
        %p366 = scmp.lt.s32.totalorder %s363, 7
        %s367 = scalar_select %p366, %s363, 7
        %s368 = smul.addr %s365, 8
        %s369 = sadd.s32 %s367, %s368
        %s370 = smul.addr %s369, 8
        %s371 = scalar_lea.vmem %s5, %s370
        %s372 = smul.u32 8, %s21
      $region44: #{downsample_pallas.1} parent=19 // pred_fallthru
        _
    $region20: #{downsample_pallas.1} parent=5 // pred_fallthru
      _
    %p373 = scmp.le.s32.totalorder 1, %s13
    %p374 = scmp.lt.s32.totalorder %s13, 3
    %p375 = pnand %p373, %p374
    %p376 = pneg %p375
    // Predicated region
    $region45: #{downsample_pallas.1} parent=5 // pred_check
      _
    $region46: #{downsample_pallas.1} parent=5 // pred_check_branch
      %378 = sbr.rel (%p375) target = $region48
    $region47: #{downsample_pallas.1} parent=5 // pred_region
      %s379 = ssub.s32 %s13, 1
      %s380 = smul.u32 8, %s23
      %s381 = ssub.s32 9, %s380
      %p382 = scmp.lt.s32.totalorder %s381, 8
      %s383 = scalar_select %p382, %s381, 8
      %s384 = smul.u32 8, %s383
      %s385 = smul.u32 %s384, 2
      %p386 = scmp.lt.s32.totalorder %s22, 1
      %s387 = scalar_select %p386, %s22, 1
      %p388 = scmp.lt.s32.totalorder %s380, 8
      %s389 = scalar_select %p388, %s380, 8
      %s390 = smul.addr %s389, 2
      %s391 = smul.addr %s387, 18
      %s392 = sadd.s32 %s390, %s391
      %s393 = smul.addr %s392, 8
      %s394 = scalar_lea.vmem %s0, %s393
      %p395 = pneg %p53
      %p396 = pneg %p50
      %s397 = sadd.s32 %s23, 1
      %s398 = smul.u32 %s397, 8
      %p399 = scmp.lt.s32.totalorder %s22, 1
      %s400 = scalar_select %p399, %s22, 1
      %p401 = scmp.lt.s32.totalorder %s398, 8
      %s402 = scalar_select %p401, %s398, 8
      %s403 = smul.addr %s402, 2
      %s404 = smul.addr %s400, 18
      %s405 = sadd.s32 %s403, %s404
      %s406 = smul.addr %s405, 8
      %s407 = scalar_lea.vmem %s1, %s406
      %p408 = pneg %p85
      %p409 = pneg %p82
      %s410 = smul.u32 8, %s23
      %s411 = ssub.s32 9, %s410
      %p412 = scmp.lt.s32.totalorder %s411, 8
      %s413 = scalar_select %p412, %s411, 8
      %s414 = smul.u32 8, %s413
      %p415 = scmp.lt.s32.totalorder %s22, 1
      %s416 = scalar_select %p415, %s22, 1
      %p417 = scmp.lt.s32.totalorder %s410, 8
      %s418 = scalar_select %p417, %s410, 8
      %s419 = smul.addr %s416, 9
      %s420 = sadd.s32 %s418, %s419
      %s421 = smul.addr %s420, 8
      %s422 = scalar_lea.vmem %s2, %s421
      %p423 = pneg %p113
      %p424 = pneg %p110
      %s425 = sadd.s32 %s23, 1
      %s426 = smul.u32 %s425, 8
      %p427 = scmp.lt.s32.totalorder %s22, 1
      %s428 = scalar_select %p427, %s22, 1
      %p429 = scmp.lt.s32.totalorder %s426, 8
      %s430 = scalar_select %p429, %s426, 8
      %s431 = smul.addr %s428, 9
      %s432 = sadd.s32 %s430, %s431
      %s433 = smul.addr %s432, 8
      %s434 = scalar_lea.vmem %s3, %s433
      %p435 = pneg %p145
      %p436 = pneg %p142
      %s437 = smul.u32 8, %s23
      %p438 = scmp.lt.s32.totalorder %s22, 1
      %s439 = scalar_select %p438, %s22, 1
      %p440 = scmp.lt.s32.totalorder %s437, 7
      %s441 = scalar_select %p440, %s437, 7
      %s442 = smul.addr %s441, 2
      %s443 = smul.addr %s439, 16
      %s444 = sadd.s32 %s442, %s443
      %s445 = smul.addr %s444, 8
      %s446 = scalar_lea.vmem %s4, %s445
      %p447 = pneg %p173
      %p448 = pneg %p170
      %s449 = smul.u32 8, %s23
      %p450 = scmp.lt.s32.totalorder %s22, 1
      %s451 = scalar_select %p450, %s22, 1
      %p452 = scmp.lt.s32.totalorder %s449, 7
      %s453 = scalar_select %p452, %s449, 7
      %s454 = smul.addr %s451, 8
      %s455 = sadd.s32 %s453, %s454
      %s456 = smul.addr %s455, 8
      %s457 = scalar_lea.vmem %s5, %s456
      %p458 = pneg %p201
      %p459 = pneg %p198
      %p460 = pneg %p222
      %p461 = pneg %p219
      %p462 = pneg %p248
      %p463 = pneg %p245
      %p464 = scmp.lt.s32.totalorder %s22, 1
      %s465 = scalar_select %p464, %s22, 1
      %s466 = smul.addr %s465, 8
      %s467 = scalar_lea.vmem %s7, %s466
      %s468 = smul.u32 8, %s23
      %s469 = ssub.s32 9, %s468
      %p470 = scmp.lt.s32.totalorder %s469, 8
      %s471 = scalar_select %p470, %s469, 8
      %s472 = smul.u32 8, %s471
      %s473 = smul.u32 %s472, 2
      %p474 = scmp.lt.s32.totalorder %s22, 1
      %s475 = scalar_select %p474, %s22, 1
      %p476 = scmp.lt.s32.totalorder %s468, 8
      %s477 = scalar_select %p476, %s468, 8
      %s478 = smul.addr %s477, 2
      %s479 = smul.addr %s475, 18
      %s480 = sadd.s32 %s478, %s479
      %s481 = smul.addr %s480, 8
      %s482 = scalar_lea.vmem %s0, %s481
      %s483 = smul.u32 8, %s23
      %s484 = ssub.s32 9, %s483
      %p485 = scmp.lt.s32.totalorder %s484, 8
      %s486 = scalar_select %p485, %s484, 8
      %s487 = smul.u32 8, %s486
      %s488 = smul.u32 %s487, 2
      %s489 = sadd.s32 %s23, 1
      %s490 = smul.u32 %s489, 8
      %p491 = scmp.lt.s32.totalorder %s22, 1
      %s492 = scalar_select %p491, %s22, 1
      %p493 = scmp.lt.s32.totalorder %s490, 8
      %s494 = scalar_select %p493, %s490, 8
      %s495 = smul.addr %s494, 2
      %s496 = smul.addr %s492, 18
      %s497 = sadd.s32 %s495, %s496
      %s498 = smul.addr %s497, 8
      %s499 = scalar_lea.vmem %s1, %s498
      %s500 = sadd.s32 %s23, 1
      %s501 = smul.u32 %s500, 8
      %s502 = smul.u32 8, %s23
      %s503 = ssub.s32 9, %s502
      %p504 = scmp.lt.s32.totalorder %s503, 8
      %s505 = scalar_select %p504, %s503, 8
      %s506 = smul.u32 8, %s505
      %p507 = scmp.lt.s32.totalorder %s22, 1
      %s508 = scalar_select %p507, %s22, 1
      %p509 = scmp.lt.s32.totalorder %s502, 8
      %s510 = scalar_select %p509, %s502, 8
      %s511 = smul.addr %s508, 9
      %s512 = sadd.s32 %s510, %s511
      %s513 = smul.addr %s512, 8
      %s514 = scalar_lea.vmem %s2, %s513
      %s515 = smul.u32 8, %s23
      %s516 = ssub.s32 9, %s515
      %p517 = scmp.lt.s32.totalorder %s516, 8
      %s518 = scalar_select %p517, %s516, 8
      %s519 = smul.u32 8, %s518
      %s520 = sadd.s32 %s23, 1
      %s521 = smul.u32 %s520, 8
      %p522 = scmp.lt.s32.totalorder %s22, 1
      %s523 = scalar_select %p522, %s22, 1
      %p524 = scmp.lt.s32.totalorder %s521, 8
      %s525 = scalar_select %p524, %s521, 8
      %s526 = smul.addr %s523, 9
      %s527 = sadd.s32 %s525, %s526
      %s528 = smul.addr %s527, 8
      %s529 = scalar_lea.vmem %s3, %s528
      %s530 = sadd.s32 %s23, 1
      %s531 = smul.u32 %s530, 8
      %s532 = smul.u32 8, %s23
      %p533 = scmp.lt.s32.totalorder %s22, 1
      %s534 = scalar_select %p533, %s22, 1
      %p535 = scmp.lt.s32.totalorder %s532, 7
      %s536 = scalar_select %p535, %s532, 7
      %s537 = smul.addr %s536, 2
      %s538 = smul.addr %s534, 16
      %s539 = sadd.s32 %s537, %s538
      %s540 = smul.addr %s539, 8
      %s541 = scalar_lea.vmem %s4, %s540
      %s542 = smul.u32 8, %s23
      %s543 = smul.u32 8, %s23
      %p544 = scmp.lt.s32.totalorder %s22, 1
      %s545 = scalar_select %p544, %s22, 1
      %p546 = scmp.lt.s32.totalorder %s543, 7
      %s547 = scalar_select %p546, %s543, 7
      %s548 = smul.addr %s545, 8
      %s549 = sadd.s32 %s547, %s548
      %s550 = smul.addr %s549, 8
      %s551 = scalar_lea.vmem %s5, %s550
      %s552 = smul.u32 8, %s23
      %p553 = scmp.lt.s32.totalorder %s22, 1
      %s554 = scalar_select %p553, %s22, 1
      %s555 = smul.addr %s554, 8
      %s556 = scalar_lea.vmem %s7, %s555
      %v557 = vld [vmem:[%s482] sm:$0xff]
      %v558 = vld [vmem:[%s482 + $0x8] sm:$0x1]
      %v559 = vld [vmem:[%s482 + $0x10] sm:$0xff]
      %v560 = vld [vmem:[%s482 + $0x18] sm:$0x1]
      %v561 = vld [vmem:[%s482 + $0x20] sm:$0xff]
      %v562 = vld [vmem:[%s482 + $0x28] sm:$0x1]
      %v563 = vld [vmem:[%s482 + $0x30] sm:$0xff]
      %v564 = vld [vmem:[%s482 + $0x38] sm:$0x1]
      %v565 = vld [vmem:[%s482 + $0x40] sm:$0xff]
      %v566 = vld [vmem:[%s482 + $0x48] sm:$0x1]
      %v567 = vld [vmem:[%s482 + $0x50] sm:$0xff]
      %v568 = vld [vmem:[%s482 + $0x58] sm:$0x1]
      %v569 = vld [vmem:[%s482 + $0x60] sm:$0xff]
      %v570 = vld [vmem:[%s482 + $0x68] sm:$0x1]
      %v571 = vld [vmem:[%s482 + $0x70] sm:$0xff]
      %v572 = vld [vmem:[%s482 + $0x78] sm:$0x1]
      %v573 = vld [vmem:[%s514] sm:$0xff]
      %v574 = vld [vmem:[%s514 + $0x8] sm:$0xff]
      %v575 = vld [vmem:[%s514 + $0x10] sm:$0xff]
      %v576 = vld [vmem:[%s514 + $0x18] sm:$0xff]
      %v577 = vld [vmem:[%s514 + $0x20] sm:$0xff]
      %v578 = vld [vmem:[%s514 + $0x28] sm:$0xff]
      %v579 = vld [vmem:[%s514 + $0x30] sm:$0xff]
      %v580 = vld [vmem:[%s514 + $0x38] sm:$0xff]
      %v581 = vld [vmem:[%s541] sm:$0xff]
      %v582 = vld [vmem:[%s541 + $0x8] sm:$0x1]
      %v583 = vld [vmem:[%s541 + $0x10] sm:$0xff]
      %v584 = vld [vmem:[%s541 + $0x18] sm:$0x1]
      %v585 = vld [vmem:[%s541 + $0x20] sm:$0xff]
      %v586 = vld [vmem:[%s541 + $0x28] sm:$0x1]
      %v587 = vld [vmem:[%s541 + $0x30] sm:$0xff]
      %v588 = vld [vmem:[%s541 + $0x38] sm:$0x1]
      %v589 = vld [vmem:[%s541 + $0x40] sm:$0xff]
      %v590 = vld [vmem:[%s541 + $0x48] sm:$0x1]
      %v591 = vld [vmem:[%s541 + $0x50] sm:$0xff]
      %v592 = vld [vmem:[%s541 + $0x58] sm:$0x1]
      %v593 = vld [vmem:[%s541 + $0x60] sm:$0xff]
      %v594 = vld [vmem:[%s541 + $0x68] sm:$0x1]
      %v595 = vld [vmem:[%s541 + $0x70] sm:$0xff]
      %v596 = vld [vmem:[%s541 + $0x78] sm:$0x1]
      %v597 = vld [vmem:[%s551] sm:$0xff]
      %v598 = vld [vmem:[%s551 + $0x8] sm:$0xff]
      %v599 = vld [vmem:[%s551 + $0x10] sm:$0xff]
      %v600 = vld [vmem:[%s551 + $0x18] sm:$0xff]
      %v601 = vld [vmem:[%s551 + $0x20] sm:$0xff]
      %v602 = vld [vmem:[%s551 + $0x28] sm:$0xff]
      %v603 = vld [vmem:[%s551 + $0x30] sm:$0xff]
      %v604 = vld [vmem:[%s551 + $0x38] sm:$0xff]
      %v605 = vld [vmem:[%s499] sm:$0xff]
      %v606 = vld [vmem:[%s499 + $0x8] sm:$0x1]
      %v607 = vld [vmem:[%s529] sm:$0xff]
      %vm624 = vcmask 1046528
      %v625 = vrot.slane %v557, 1
      %v626 = vrot.slane %v558, 1
      %v627 = vsel %vm624, %v625, %v626
      %v628 = vrot.slane %v559, 1
      %v629 = vrot.slane %v560, 1
      %v630 = vsel %vm624, %v628, %v629
      %v631 = vrot.slane %v561, 1
      %v632 = vrot.slane %v562, 1
      %v633 = vsel %vm624, %v631, %v632
      %v634 = vrot.slane %v563, 1
      %v635 = vrot.slane %v564, 1
      %v636 = vsel %vm624, %v634, %v635
      %v637 = vrot.slane %v565, 1
      %v638 = vrot.slane %v566, 1
      %v639 = vsel %vm624, %v637, %v638
      %v640 = vrot.slane %v567, 1
      %v641 = vrot.slane %v568, 1
      %v642 = vsel %vm624, %v640, %v641
      %v643 = vrot.slane %v569, 1
      %v644 = vrot.slane %v570, 1
      %v645 = vsel %vm624, %v643, %v644
      %v646 = vrot.slane %v571, 1
      %v647 = vrot.slane %v572, 1
      %v648 = vsel %vm624, %v646, %v647
      %v665 = vrot.slane %v581, 1
      %v666 = vrot.slane %v582, 1
      %v667 = vsel %vm624, %v665, %v666
      %v668 = vrot.slane %v583, 1
      %v669 = vrot.slane %v584, 1
      %v670 = vsel %vm624, %v668, %v669
      %v671 = vrot.slane %v585, 1
      %v672 = vrot.slane %v586, 1
      %v673 = vsel %vm624, %v671, %v672
      %v674 = vrot.slane %v587, 1
      %v675 = vrot.slane %v588, 1
      %v676 = vsel %vm624, %v674, %v675
      %v677 = vrot.slane %v589, 1
      %v678 = vrot.slane %v590, 1
      %v679 = vsel %vm624, %v677, %v678
      %v680 = vrot.slane %v591, 1
      %v681 = vrot.slane %v592, 1
      %v682 = vsel %vm624, %v680, %v681
      %v683 = vrot.slane %v593, 1
      %v684 = vrot.slane %v594, 1
      %v685 = vsel %vm624, %v683, %v684
      %v686 = vrot.slane %v595, 1
      %v687 = vrot.slane %v596, 1
      %v688 = vsel %vm624, %v686, %v687
      %v691 = vrot.slane %v605, 1
      %v692 = vrot.slane %v606, 1
      %v693 = vsel %vm624, %v691, %v692
      %702 = vrot.lane.b32.xlu0 %v573, 4
      %v703 = vpop.permute.xlu0 %702
      %704 = vrot.lane.b32.xlu0 %v574, 4
      %v705 = vpop.permute.xlu0 %704
      %706 = vrot.lane.b32.xlu0 %v575, 4
      %v707 = vpop.permute.xlu0 %706
      %708 = vrot.lane.b32.xlu0 %v576, 4
      %v709 = vpop.permute.xlu0 %708
      %710 = vrot.lane.b32.xlu0 %v577, 4
      %v711 = vpop.permute.xlu0 %710
      %712 = vrot.lane.b32.xlu0 %v578, 4
      %v713 = vpop.permute.xlu0 %712
      %714 = vrot.lane.b32.xlu0 %v579, 4
      %v715 = vpop.permute.xlu0 %714
      %716 = vrot.lane.b32.xlu0 %v580, 4
      %v717 = vpop.permute.xlu0 %716
      %726 = vrot.lane.b32.xlu0 %v627, 8
      %v727 = vpop.permute.xlu0 %726
      %728 = vrot.lane.b32.xlu0 %v630, 8
      %v729 = vpop.permute.xlu0 %728
      %730 = vrot.lane.b32.xlu0 %v633, 8
      %v731 = vpop.permute.xlu0 %730
      %732 = vrot.lane.b32.xlu0 %v636, 8
      %v733 = vpop.permute.xlu0 %732
      %734 = vrot.lane.b32.xlu0 %v639, 8
      %v735 = vpop.permute.xlu0 %734
      %736 = vrot.lane.b32.xlu0 %v642, 8
      %v737 = vpop.permute.xlu0 %736
      %738 = vrot.lane.b32.xlu0 %v645, 8
      %v739 = vpop.permute.xlu0 %738
      %740 = vrot.lane.b32.xlu0 %v648, 8
      %v741 = vpop.permute.xlu0 %740
      %750 = vrot.lane.b32.xlu0 %v581, 12
      %v751 = vpop.permute.xlu0 %750
      %752 = vrot.lane.b32.xlu0 %v583, 12
      %v753 = vpop.permute.xlu0 %752
      %754 = vrot.lane.b32.xlu0 %v585, 12
      %v755 = vpop.permute.xlu0 %754
      %756 = vrot.lane.b32.xlu0 %v587, 12
      %v757 = vpop.permute.xlu0 %756
      %758 = vrot.lane.b32.xlu0 %v589, 12
      %v759 = vpop.permute.xlu0 %758
      %760 = vrot.lane.b32.xlu0 %v591, 12
      %v761 = vpop.permute.xlu0 %760
      %762 = vrot.lane.b32.xlu0 %v593, 12
      %v763 = vpop.permute.xlu0 %762
      %764 = vrot.lane.b32.xlu0 %v595, 12
      %v765 = vpop.permute.xlu0 %764
      %782 = vrot.lane.b32.xlu0 %v597, 16
      %v783 = vpop.permute.xlu0 %782
      %784 = vrot.lane.b32.xlu0 %v598, 16
      %v785 = vpop.permute.xlu0 %784
      %786 = vrot.lane.b32.xlu0 %v599, 16
      %v787 = vpop.permute.xlu0 %786
      %788 = vrot.lane.b32.xlu0 %v600, 16
      %v789 = vpop.permute.xlu0 %788
      %790 = vrot.lane.b32.xlu0 %v601, 16
      %v791 = vpop.permute.xlu0 %790
      %792 = vrot.lane.b32.xlu0 %v602, 16
      %v793 = vpop.permute.xlu0 %792
      %794 = vrot.lane.b32.xlu0 %v603, 16
      %v795 = vpop.permute.xlu0 %794
      %796 = vrot.lane.b32.xlu0 %v604, 16
      %v797 = vpop.permute.xlu0 %796
      %806 = vrot.lane.b32.xlu0 %v667, 20
      %v807 = vpop.permute.xlu0 %806
      %808 = vrot.lane.b32.xlu0 %v670, 20
      %v809 = vpop.permute.xlu0 %808
      %810 = vrot.lane.b32.xlu0 %v673, 20
      %v811 = vpop.permute.xlu0 %810
      %812 = vrot.lane.b32.xlu0 %v676, 20
      %v813 = vpop.permute.xlu0 %812
      %814 = vrot.lane.b32.xlu0 %v679, 20
      %v815 = vpop.permute.xlu0 %814
      %816 = vrot.lane.b32.xlu0 %v682, 20
      %v817 = vpop.permute.xlu0 %816
      %818 = vrot.lane.b32.xlu0 %v685, 20
      %v819 = vpop.permute.xlu0 %818
      %820 = vrot.lane.b32.xlu0 %v688, 20
      %v821 = vpop.permute.xlu0 %820
      %830 = vrot.lane.b32.xlu0 %v559, 24
      %v831 = vpop.permute.xlu0 %830
      %832 = vrot.lane.b32.xlu0 %v561, 24
      %v833 = vpop.permute.xlu0 %832
      %834 = vrot.lane.b32.xlu0 %v563, 24
      %v835 = vpop.permute.xlu0 %834
      %836 = vrot.lane.b32.xlu0 %v565, 24
      %v837 = vpop.permute.xlu0 %836
      %838 = vrot.lane.b32.xlu0 %v567, 24
      %v839 = vpop.permute.xlu0 %838
      %840 = vrot.lane.b32.xlu0 %v569, 24
      %v841 = vpop.permute.xlu0 %840
      %842 = vrot.lane.b32.xlu0 %v571, 24
      %v843 = vpop.permute.xlu0 %842
      %844 = vrot.lane.b32.xlu0 %v605, 24
      %v845 = vpop.permute.xlu0 %844
      %855 = vrot.lane.b32.xlu0 %v574, 28
      %v856 = vpop.permute.xlu0 %855
      %857 = vrot.lane.b32.xlu0 %v575, 28
      %v858 = vpop.permute.xlu0 %857
      %859 = vrot.lane.b32.xlu0 %v576, 28
      %v860 = vpop.permute.xlu0 %859
      %861 = vrot.lane.b32.xlu0 %v577, 28
      %v862 = vpop.permute.xlu0 %861
      %863 = vrot.lane.b32.xlu0 %v578, 28
      %v864 = vpop.permute.xlu0 %863
      %865 = vrot.lane.b32.xlu0 %v579, 28
      %v866 = vpop.permute.xlu0 %865
      %867 = vrot.lane.b32.xlu0 %v580, 28
      %v868 = vpop.permute.xlu0 %867
      %869 = vrot.lane.b32.xlu0 %v607, 28
      %v870 = vpop.permute.xlu0 %869
      %879 = vrot.lane.b32.xlu0 %v630, 32
      %v880 = vpop.permute.xlu0 %879
      %881 = vrot.lane.b32.xlu0 %v633, 32
      %v882 = vpop.permute.xlu0 %881
      %883 = vrot.lane.b32.xlu0 %v636, 32
      %v884 = vpop.permute.xlu0 %883
      %885 = vrot.lane.b32.xlu0 %v639, 32
      %v886 = vpop.permute.xlu0 %885
      %887 = vrot.lane.b32.xlu0 %v642, 32
      %v888 = vpop.permute.xlu0 %887
      %889 = vrot.lane.b32.xlu0 %v645, 32
      %v890 = vpop.permute.xlu0 %889
      %891 = vrot.lane.b32.xlu0 %v648, 32
      %v892 = vpop.permute.xlu0 %891
      %893 = vrot.lane.b32.xlu0 %v693, 32
      %v894 = vpop.permute.xlu0 %893
      %vm903 = vcmask 31744
      %v904 = vsel %vm903, %v557, %v703
      %v905 = vsel %vm903, %v559, %v705
      %v906 = vsel %vm903, %v561, %v707
      %v907 = vsel %vm903, %v563, %v709
      %v908 = vsel %vm903, %v565, %v711
      %v909 = vsel %vm903, %v567, %v713
      %v910 = vsel %vm903, %v569, %v715
      %v911 = vsel %vm903, %v571, %v717
      %vm912 = vcmask 64512
      %v913 = vsel %vm912, %v904, %v727
      %v914 = vsel %vm912, %v905, %v729
      %v915 = vsel %vm912, %v906, %v731
      %v916 = vsel %vm912, %v907, %v733
      %v917 = vsel %vm912, %v908, %v735
      %v918 = vsel %vm912, %v909, %v737
      %v919 = vsel %vm912, %v910, %v739
      %v920 = vsel %vm912, %v911, %v741
      %vm921 = vcmask 97280
      %v922 = vsel %vm921, %v913, %v751
      %v923 = vsel %vm921, %v914, %v753
      %v924 = vsel %vm921, %v915, %v755
      %v925 = vsel %vm921, %v916, %v757
      %v926 = vsel %vm921, %v917, %v759
      %v927 = vsel %vm921, %v918, %v761
      %v928 = vsel %vm921, %v919, %v763
      %v929 = vsel %vm921, %v920, %v765
      %vm930 = vcmask 130048
      %v931 = vsel %vm930, %v922, %v783
      %v932 = vsel %vm930, %v923, %v785
      %v933 = vsel %vm930, %v924, %v787
      %v934 = vsel %vm930, %v925, %v789
      %v935 = vsel %vm930, %v926, %v791
      %v936 = vsel %vm930, %v927, %v793
      %v937 = vsel %vm930, %v928, %v795
      %v938 = vsel %vm930, %v929, %v797
      %vm939 = vcmask 162816
      %v940 = vsel %vm939, %v931, %v807
      %v941 = vsel %vm939, %v932, %v809
      %v942 = vsel %vm939, %v933, %v811
      %v943 = vsel %vm939, %v934, %v813
      %v944 = vsel %vm939, %v935, %v815
      %v945 = vsel %vm939, %v936, %v817
      %v946 = vsel %vm939, %v937, %v819
      %v947 = vsel %vm939, %v938, %v821
      %vm948 = vcmask 195584
      %v949 = vsel %vm948, %v940, %v831
      %v950 = vsel %vm948, %v941, %v833
      %v951 = vsel %vm948, %v942, %v835
      %v952 = vsel %vm948, %v943, %v837
      %v953 = vsel %vm948, %v944, %v839
      %v954 = vsel %vm948, %v945, %v841
      %v955 = vsel %vm948, %v946, %v843
      %v956 = vsel %vm948, %v947, %v845
      %vm957 = vcmask 228352
      %v958 = vsel %vm957, %v949, %v856
      %v959 = vsel %vm957, %v950, %v858
      %v960 = vsel %vm957, %v951, %v860
      %v961 = vsel %vm957, %v952, %v862
      %v962 = vsel %vm957, %v953, %v864
      %v963 = vsel %vm957, %v954, %v866
      %v964 = vsel %vm957, %v955, %v868
      %v965 = vsel %vm957, %v956, %v870
      %vm966 = vcmask 261120
      %v967 = vsel %vm966, %v958, %v880
      %v968 = vsel %vm966, %v959, %v882
      %v969 = vsel %vm966, %v960, %v884
      %v970 = vsel %vm966, %v961, %v886
      %v971 = vsel %vm966, %v962, %v888
      %v972 = vsel %vm966, %v963, %v890
      %v973 = vsel %vm966, %v964, %v892
      %v974 = vsel %vm966, %v965, %v894
      %v975 = vld [vmem:[%s6] sm:$0xff]
      %v976 = vld [vmem:[%s6 + $0x8] sm:$0xff]
      %v977 = vld [vmem:[%s6 + $0x10] sm:$0xff]
      %v978 = vld [vmem:[%s6 + $0x18] sm:$0xff]
      %v979 = vld [vmem:[%s6 + $0x20] sm:$0xf]
      %vm980 = vcmask 293888
      %v982 = vsel %vm980, %v967, 0
      %v985 = vsel %vm980, %v968, 0
      %v988 = vsel %vm980, %v969, 0
      %v991 = vsel %vm980, %v970, 0
      %v994 = vsel %vm980, %v971, 0
      %v997 = vsel %vm980, %v972, 0
      %v1000 = vsel %vm980, %v973, 0
      %v1003 = vsel %vm980, %v974, 0
      %vm1005 = vcmask 1043456
      %v1007 = vsel %vm1005, %v979, 0
      %1009 = vmatpush.msra.mxu0 0.0
      %1010 = vmatpush.msra.mxu0 0.0
      %1011 = vmatpush.msra.mxu0 0.0
      %1012 = vmatpush.msra.mxu0 0.0
      %1013 = vmatpush.msra.mxu0 0.0
      %1014 = vmatpush.msra.mxu0 0.0
      %1015 = vmatpush.msra.mxu0 0.0
      %1016 = vmatpush.msra.mxu0 0.0
      %1017 = vmatpush.msra.mxu0 0.0
      %1018 = vmatpush.msra.mxu0 0.0
      %1019 = vmatpush.msra.mxu0 0.0
      %1020 = vmatpush.msra.mxu0 %v1007
      %1021 = vmatpush.msra.mxu0 %v978
      %1022 = vmatpush.msra.mxu0 %v977
      %1023 = vmatpush.msra.mxu0 %v976
      %1024 = vmatpush.msra.mxu0 %v975
      %1025 = vmatmul.f32.gmra.mxu0 %v982
      %v1026 = vpop.f32.mrf.mxu0
      %v1027 = vadd.f32 0.0, %v1026
      %1028 = vmatmul.f32.gmra.mxu0 %v985
      %v1029 = vpop.f32.mrf.mxu0
      %v1030 = vadd.f32 0.0, %v1029
      %1031 = vmatmul.f32.gmra.mxu0 %v988
      %v1032 = vpop.f32.mrf.mxu0
      %v1033 = vadd.f32 0.0, %v1032
      %1034 = vmatmul.f32.gmra.mxu0 %v991
      %v1035 = vpop.f32.mrf.mxu0
      %v1036 = vadd.f32 0.0, %v1035
      %1037 = vmatmul.f32.gmra.mxu0 %v994
      %v1038 = vpop.f32.mrf.mxu0
      %v1039 = vadd.f32 0.0, %v1038
      %1040 = vmatmul.f32.gmra.mxu0 %v997
      %v1041 = vpop.f32.mrf.mxu0
      %v1042 = vadd.f32 0.0, %v1041
      %1043 = vmatmul.f32.gmra.mxu0 %v1000
      %v1044 = vpop.f32.mrf.mxu0
      %v1045 = vadd.f32 0.0, %v1044
      %1046 = vmatmul.f32.gmra.mxu0 %v1003
      %v1047 = vpop.f32.mrf.mxu0
      %v1048 = vadd.f32 0.0, %v1047
      %1049 = vdwg.mxu0
      %1050 = vxpose.xlu0.b32.start [1/16] %v1027, 128
      %1051 = vxpose.xlu0.b32.cont [2/16] %v1030, 128
      %1052 = vxpose.xlu0.b32.cont [3/16] %v1033, 128
      %1053 = vxpose.xlu0.b32.cont [4/16] %v1036, 128
      %1054 = vxpose.xlu0.b32.cont [5/16] %v1039, 128
      %1055 = vxpose.xlu0.b32.cont [6/16] %v1042, 128
      %1056 = vxpose.xlu0.b32.cont [7/16] %v1045, 128
      %1057 = vxpose.xlu0.b32.cont [8/16] %v1048, 128
      %1058 = vxpose.xlu0.b32.cont [9/16] 0.0, 128
      %1059 = vxpose.xlu0.b32.cont [10/16] 0.0, 128
      %1060 = vxpose.xlu0.b32.cont [11/16] 0.0, 128
      %1061 = vxpose.xlu0.b32.cont [12/16] 0.0, 128
      %1062 = vxpose.xlu0.b32.cont [13/16] 0.0, 128
      %1063 = vxpose.xlu0.b32.cont [14/16] 0.0, 128
      %1064 = vxpose.xlu0.b32.cont [15/16] 0.0, 128
      %1065 = vxpose.xlu0.b32.end [16/16] 0.0, 128
      %v1066 = vpop.trf.xlu0
      %v1067 = vpop.trf.xlu0
      %v1068 = vpop.trf.xlu0
      %v1069 = vpop.trf.xlu0
      %v1070 = vpop.trf.xlu0
      %v1071 = vpop.trf.xlu0
      %v1072 = vpop.trf.xlu0
      %v1073 = vpop.trf.xlu0
      %v1074 = vpop.trf.xlu0
      %v1075 = vpop.trf.xlu0
      %v1076 = vpop.trf.xlu0
      %v1077 = vpop.trf.xlu0
      %v1078 = vpop.trf.xlu0
      %v1079 = vpop.trf.xlu0
      %v1080 = vpop.trf.xlu0
      %v1081 = vpop.trf.xlu0
      %vm1082 = vcmask 523264
      %1083 = vst.msk [vmem:[%s556] sm:$0xff] %vm1082, %v1066
      %p1084 = scmp.eq.s32.totalorder %s23, 0
      // Predicated region
      $region49: #{downsample_pallas.1} parent=47 // pred_check
        %p1085 = pneg %p1084
      $region50: #{downsample_pallas.1} parent=47 // pred_check_branch
        %1087 = sbr.rel (%p1085) target = $region52
      $region51: #{downsample_pallas.1} parent=47 // pred_region
        %v1088 = vld [vmem:[%s556] sm:$0xff]
        %v1089 = vsel %vm1082, %v1088, 0.0
        %1090 = vadd.xlane.f32.xlu0 %v1089
        %v1091 = vpop.xlane.xlu0 %1090
        %v1092 = vrcp.pop 64.0
        %v1093 = vmul.f32 64.0, %v1092
        %v1094 = vsub.f32 1.0, %v1093
        %v1095 = vmul.f32 %v1092, %v1094
        %v1096 = vadd.f32 %v1092, %v1095
        %vm1097 = vweird.f32 %v1092
        %v1098 = vsel %vm1097, %v1092, %v1096
        %v1099 = vmul.f32 %v1091, %v1098
        %v1100 = vsub.f32 %v1088, %v1099
        %v1101 = vmul.f32 %v1100, %v1100
        %v1102 = vsel %vm1082, %v1101, 0.0
        %1103 = vadd.xlane.f32.xlu0 %v1102
        %v1104 = vpop.xlane.xlu0 %1103
        %v1105 = vmul.f32 %v1104, %v1098
        %v1106 = vadd.f32 %v1105, 1e-05
        %v1107 = vrsqrt.pop %v1106
        %v1108 = vmul.f32 %v1107, %v1106
        %v1109 = vmul.f32 %v1108, %v1107
        %v1110 = vmul.f32 0.5, %v1109
        %v1111 = vsub.f32 1.5, %v1110
        %v1112 = vmul.f32 %v1107, %v1111
        %vm1113 = vweird.f32 %v1106
        %vm1114 = vweird.f32 %v1107
        %vm1115 = vmor %vm1113, %vm1114
        %v1116 = vsel %vm1115, %v1107, %v1112
        %v1117 = vmul.f32 %v1100, %v1116
        %v1118 = vmul.f32 %v1117, 0.5
        %v1119 = vmul.f32 %v1117, 0.70710677
        %v1120 = vmul.f32 %v1119, %v1119
        %v1121 = vmin.f32 16.0, %v1120
        %v1122 = vmul.f32 %v1121, 2.1237322e-06
        %v1123 = vadd.f32 %v1122, 0.00028619796
        %v1124 = vmul.f32 %v1121, %v1123
        %v1125 = vadd.f32 %v1124, 0.0036580483
        %v1126 = vmul.f32 %v1121, %v1125
        %v1127 = vadd.f32 %v1126, 0.05243302
        %v1128 = vmul.f32 %v1121, %v1127
        %v1129 = vadd.f32 %v1128, 0.18741608
        %v1130 = vmul.f32 %v1121, %v1129
        %v1131 = vadd.f32 %v1130, 1.1283791
        %v1132 = vmul.f32 %v1119, %v1131
        %v1133 = vmul.f32 %v1121, 3.8918573e-05
        %v1134 = vadd.f32 %v1133, 0.001143296
        %v1135 = vmul.f32 %v1121, %v1134
        %v1136 = vadd.f32 %v1135, 0.014752088
        %v1137 = vmul.f32 %v1121, %v1136
        %v1138 = vadd.f32 %v1137, 0.112945676
        %v1139 = vmul.f32 %v1121, %v1138
        %v1140 = vadd.f32 %v1139, 0.4994258
        %v1141 = vmul.f32 %v1121, %v1140
        %v1142 = vadd.f32 %v1141, 1.0
        %v1143 = vrcp.pop %v1142
        %v1144 = vmul.f32 %v1142, %v1143
        %v1145 = vsub.f32 1.0, %v1144
        %v1146 = vmul.f32 %v1143, %v1145
        %v1147 = vadd.f32 %v1143, %v1146
        %vm1148 = vweird.f32 %v1142
        %vm1149 = vweird.f32 %v1143
        %vm1150 = vmor %vm1148, %vm1149
        %v1151 = vsel %vm1150, %v1143, %v1147
        %v1152 = vand.u32 2147483647, %v1142
        %vm1153 = vcmp.eq.f32.partialorder %v1152, 8.507059e+37
        %v1154 = vand.u32 %v1142, 2147483648
        %v1155 = vor.u32 1.1754944e-38, %v1154
        %v1156 = vsel %vm1153, %v1155, %v1151
        %v1157 = vmul.f32 %v1132, %v1156
        %v1158 = vmin.f32 %v1157, 1.0
        %v1159 = vmax.f32 %v1158, -1.0
        %v1160 = vadd.f32 %v1159, 1.0
        %v1161 = vmul.f32 %v1118, %v1160
        %1162 = vst.msk [vmem:[%s556] sm:$0xff] %vm1082, %v1161
      $region52: #{downsample_pallas.1} parent=47 // pred_fallthru
        _
      %p1163 = scmp.lt.s32.totalorder %s22, 1
      %s1164 = scalar_select %p1163, %s22, 1
      %s1165 = smul.addr %s1164, 8
      %s1166 = scalar_lea.vmem %s7, %s1165
      // Predicated region
      $region53: #{downsample_pallas.1} parent=47 // pred_check
        %p1167 = pneg %p245
      $region54: #{downsample_pallas.1} parent=47 // pred_check_branch
        %1169 = sbr.rel (%p1167) target = $region56
      $region55: #{downsample_pallas.1} parent=47 // pred_region
        _
      $region56: #{downsample_pallas.1} parent=47 // pred_fallthru
        _
    $region48: #{downsample_pallas.1} parent=5 // pred_fallthru
      _
    %p1170 = scmp.le.s32.totalorder 2, %s13
    // Predicated region
    $region57: #{downsample_pallas.1} parent=5 // pred_check
      %p1171 = pneg %p1170
    $region58: #{downsample_pallas.1} parent=5 // pred_check_branch
      %1173 = sbr.rel (%p1171) target = $region60
    $region59: #{downsample_pallas.1} parent=5 // pred_region
      %s1174 = ssub.s32 %s13, 2
      // Predicated region
      $region61: #{downsample_pallas.1} parent=59 // pred_check
        %p1175 = pneg %p251
      $region62: #{downsample_pallas.1} parent=59 // pred_check_branch
        %1177 = sbr.rel (%p1175) target = $region64
      $region63: #{downsample_pallas.1} parent=59 // pred_region
        %p1178 = scmp.lt.s32.totalorder %s24, 1
        %s1179 = scalar_select %p1178, %s24, 1
        %s1180 = smul.addr %s1179, 8
        %s1181 = scalar_lea.vmem %s7, %s1180
      $region64: #{downsample_pallas.1} parent=59 // pred_fallthru
        _
    $region60: #{downsample_pallas.1} parent=5 // pred_fallthru
      _
  $region6: #{downsample_pallas.1} parent=0 // loop_footer
    %s17 = sadd.s32 1, %s13
  $region7: #{downsample_pallas.1} parent=0 // loop_footer_branch
    %12 = sbr.rel target = $region3
  $region8: #{downsample_pallas.1} parent=0 // loop_exit
    _

</llo_original>
